<compile_context>
chip_gen: v7x
topology: tpu7x:2x2x1
jax: 0.10.0
libtpu: 0.0.40
codegen_flags: <defaults>
</compile_context>

<pallas_src>
import jax
import jax.numpy as jnp
from jax.experimental import pallas as pl
from jax.experimental.pallas import tpu as pltpu


def _down_conv_prelu_kernel(w_ref, b_ref, a_ref, p_ref, o_ref):
    # w_ref: (Cout, K)   full weight matrix (constant index_map -> resident)
    # b_ref: (Cout, 1)   bias
    # a_ref: (Cout, 1)   PReLU per-channel slope
    # p_ref: (K, TM)     patch tile   (lane axis = TM, lane-dense)
    # o_ref: (Cout, TM)  output tile  (lane axis = TM, lane-dense)
    acc = jnp.dot(w_ref[...], p_ref[...], preferred_element_type=jnp.float32)
    acc = acc + b_ref[...]                       # broadcast bias over lanes
    out = jnp.where(acc >= 0.0, acc, a_ref[...] * acc)   # PReLU
    o_ref[...] = out.astype(o_ref.dtype)


def _pick_tile_m(M, target=4096):
    # Lane-dense tile (multiple of 128), as large as possible up to `target`,
    # but keep at least 2 grid steps when M allows so the single grid axis can
    # shard across both TensorCores on v7x (no-op on v5e/v6e).
    half = max(128, (M // 2) // 128 * 128)
    return min(target, half)


def down_conv_block(x, weight, bias, prelu_alpha, *, tile_m=None):
    """x: (N, Cin, D, H, W) float32.  weight: (Cout, Cin, 2, 2, 2).
    bias: (Cout,).  prelu_alpha: (Cout,).  Returns (N, Cout, D//2, H//2, W//2)."""
    N, Cin, D, H, W = x.shape
    Cout = weight.shape[0]
    Do, Ho, Wo = D // 2, H // 2, W // 2

    # Conv3d(k=2, s=2, valid padding) ignores any trailing odd element.
    x = x[:, :, : 2 * Do, : 2 * Ho, : 2 * Wo]

    # --- glue: space-to-depth directly into a (K, M) patch matrix with K on
    # sublanes and the big M axis on lanes (lane-dense kernel loads/stores).
    # TODO(synk): this is still one XLA HBM copy of x; fully folding the
    # NCDHW space-to-depth into the kernel needs strided lane gathers in VMEM.
    xp = x.reshape(N, Cin, Do, 2, Ho, 2, Wo, 2)
    xp = jnp.transpose(xp, (1, 3, 5, 7, 0, 2, 4, 6))  # (Cin,2,2,2, N,Do,Ho,Wo)
    K = Cin * 8
    M = N * Do * Ho * Wo
    patches = xp.reshape(K, M)

    # weight (Cout, Cin, 2, 2, 2) -> (Cout, K): flattening order matches the
    # (Cin, 2, 2, 2) patch feature ordering above.
    w_mat = weight.reshape(Cout, K)
    b_mat = bias.reshape(Cout, 1)
    a_mat = prelu_alpha.reshape(Cout, 1)

    if tile_m is None:
        tile_m = _pick_tile_m(M)
    grid_m = -(-M // tile_m)            # cdiv: no divisibility assert
    M_pad = grid_m * tile_m
    if M_pad != M:
        patches = jnp.pad(patches, ((0, 0), (0, M_pad - M)))

    out_flat = pl.pallas_call(
        _down_conv_prelu_kernel,
        out_shape=jax.ShapeDtypeStruct((Cout, M_pad), x.dtype),
        grid_spec=pltpu.PrefetchScalarGridSpec(
            num_scalar_prefetch=0,
            grid=(grid_m,),
            in_specs=[
                pl.BlockSpec((Cout, K), lambda i: (0, 0)),    # weight (resident)
                pl.BlockSpec((Cout, 1), lambda i: (0, 0)),    # bias
                pl.BlockSpec((Cout, 1), lambda i: (0, 0)),    # prelu alpha
                pl.BlockSpec((K, tile_m), lambda i: (0, i)),  # patch tile
            ],
            out_specs=pl.BlockSpec((Cout, tile_m), lambda i: (0, i)),
        ),
        compiler_params=pltpu.CompilerParams(
            dimension_semantics=("parallel",)),
    )(w_mat, b_mat, a_mat, patches)

    # --- glue: drop padding, back to NCDHW ---
    out = out_flat[:, :M].reshape(Cout, N, Do, Ho, Wo)
    out = jnp.transpose(out, (1, 0, 2, 3, 4))
    return out


if __name__ == "__main__":
    key = jax.random.PRNGKey(0)
    k_x, k_w, k_b = jax.random.split(key, 3)

    # Small shapes consistent with the module: batch=2, in_channels=4,
    # out_channels=8, spatial=16 (cubic volume).
    N, Cin, Cout, S = 2, 4, 8, 16
    x = jax.random.normal(k_x, (N, Cin, S, S, S), dtype=jnp.float32)

    # Deterministic parameter init (synthetic, mirrors Conv3d/PReLU shapes).
    fan_in = Cin * 2 * 2 * 2
    bound = 1.0 / jnp.sqrt(fan_in)
    weight = jax.random.uniform(k_w, (Cout, Cin, 2, 2, 2),
                                minval=-bound, maxval=bound, dtype=jnp.float32)
    bias = jax.random.uniform(k_b, (Cout,), minval=-bound, maxval=bound,
                              dtype=jnp.float32)
    prelu_alpha = jnp.full((Cout,), 0.25, dtype=jnp.float32)  # PReLU default

    fwd = jax.jit(down_conv_block)
    out = fwd(x, weight, bias, prelu_alpha)
    jax.block_until_ready(out)

    # Reference check against plain-JAX conv + PReLU.
    ref = jax.lax.conv_general_dilated(
        x, weight, window_strides=(2, 2, 2), padding="VALID",
        dimension_numbers=("NCDHW", "OIDHW", "NCDHW"))
    ref = ref + bias.reshape(1, Cout, 1, 1, 1)
    ref = jnp.where(ref >= 0, ref, prelu_alpha.reshape(1, Cout, 1, 1, 1) * ref)
    assert out.shape == (N, Cout, S // 2, S // 2, S // 2)
    assert jnp.allclose(out, ref, atol=1e-5, rtol=1e-5)

    print("KERNEL_OK")
</pallas_src>

<mosaic_0001>
module attributes {stable_mosaic.version = 11 : i64} {
  func.func @_down_conv_prelu_kernel(%arg0: i32, %arg1: memref<8x32xf32, #tpu.memory_space<vmem>>, %arg2: memref<8x1xf32, #tpu.memory_space<vmem>>, %arg3: memref<8x1xf32, #tpu.memory_space<vmem>>, %arg4: memref<32x512xf32, #tpu.memory_space<vmem>>, %arg5: memref<8x512xf32, #tpu.memory_space<vmem>>) attributes {dimension_semantics = [#tpu.dimension_semantics<parallel>], iteration_bounds = array<i64: 2>, scalar_prefetch = 0 : i64, scratch_operands = 0 : i64, tpu.core_type = #tpu.core_type<tc>, window_params = [{pipeline_mode = #tpu.pipeline_mode<synchronous>, transform_indices = @transform_0, window_bounds = array<i64: 8, 32>}, {pipeline_mode = #tpu.pipeline_mode<synchronous>, transform_indices = @transform_1, window_bounds = array<i64: 8, 1>}, {pipeline_mode = #tpu.pipeline_mode<synchronous>, transform_indices = @transform_2, window_bounds = array<i64: 8, 1>}, {transform_indices = @transform_3, window_bounds = array<i64: 32, 512>}, {transform_indices = @transform_4, window_bounds = array<i64: 8, 512>}]} {
    %c0 = arith.constant 0 : index
    %c0_0 = arith.constant 0 : index
    %0 = vector.load %arg1[%c0, %c0_0] : memref<8x32xf32, #tpu.memory_space<vmem>>, vector<8x32xf32>
    %c0_1 = arith.constant 0 : index
    %c0_2 = arith.constant 0 : index
    %1 = vector.load %arg4[%c0_1, %c0_2] : memref<32x512xf32, #tpu.memory_space<vmem>>, vector<32x512xf32>
    %cst = arith.constant dense<0.000000e+00> : vector<8x512xf32>
    %2 = tpu.matmul %0, %1, %cst {dimension_numbers = #tpu.dot_dimension_numbers<[1], [0], [0], [1], [0, 0, 1, 1], [], []>} : vector<8x32xf32>, vector<32x512xf32>, vector<8x512xf32> -> vector<8x512xf32>
    %c0_3 = arith.constant 0 : index
    %c0_4 = arith.constant 0 : index
    %3 = vector.load %arg2[%c0_3, %c0_4] : memref<8x1xf32, #tpu.memory_space<vmem>>, vector<8x1xf32>
    %4 = vector.broadcast %3 : vector<8x1xf32> to vector<8x512xf32>
    %5 = arith.addf %2, %4 : vector<8x512xf32>
    %cst_5 = arith.constant 0.000000e+00 : f32
    %6 = vector.broadcast %cst_5 : f32 to vector<8x512xf32>
    %7 = arith.cmpf oge, %5, %6 : vector<8x512xf32>
    %c0_6 = arith.constant 0 : index
    %c0_7 = arith.constant 0 : index
    %8 = vector.load %arg3[%c0_6, %c0_7] : memref<8x1xf32, #tpu.memory_space<vmem>>, vector<8x1xf32>
    %9 = vector.broadcast %8 : vector<8x1xf32> to vector<8x512xf32>
    %10 = arith.mulf %9, %5 : vector<8x512xf32>
    %11 = arith.select %7, %5, %10 : vector<8x512xi1>, vector<8x512xf32>
    %c0_8 = arith.constant 0 : index
    %c0_9 = arith.constant 0 : index
    %12 = vector.load %arg5[%c0_8, %c0_9] : memref<8x512xf32, #tpu.memory_space<vmem>>, vector<8x512xf32>
    tpu.vector_store %arg5[%c0_8, %c0_9], %11 {strides = array<i32>} : memref<8x512xf32, #tpu.memory_space<vmem>>, vector<8x512xf32>,
    return
  }
  func.func @transform_0(%arg0: i32) -> (i32, i32) {
    %c0_i32 = arith.constant 0 : i32
    %c0_i32_0 = arith.constant 0 : i32
    %c0_i32_1 = arith.constant 0 : i32
    return %c0_i32, %c0_i32_0 : i32, i32
  }
  func.func @transform_1(%arg0: i32) -> (i32, i32) {
    %c0_i32 = arith.constant 0 : i32
    %c0_i32_0 = arith.constant 0 : i32
    %c0_i32_1 = arith.constant 0 : i32
    return %c0_i32, %c0_i32_0 : i32, i32
  }
  func.func @transform_2(%arg0: i32) -> (i32, i32) {
    %c0_i32 = arith.constant 0 : i32
    %c0_i32_0 = arith.constant 0 : i32
    %c0_i32_1 = arith.constant 0 : i32
    return %c0_i32, %c0_i32_0 : i32, i32
  }
  func.func @transform_3(%arg0: i32) -> (i32, i32) {
    %c0_i32 = arith.constant 0 : i32
    %c0_i32_0 = arith.constant 0 : i32
    return %c0_i32, %arg0 : i32, i32
  }
  func.func @transform_4(%arg0: i32) -> (i32, i32) {
    %c0_i32 = arith.constant 0 : i32
    %c0_i32_0 = arith.constant 0 : i32
    return %c0_i32, %arg0 : i32, i32
  }
}

</mosaic_0001>

<llo_original>
// kernel: down_conv_block.1
$region0: #{down_conv_block.1}
  #allocation0 [shape = 'u32[]', space=smem, size = 0x4, offset = 0x4, fixed_abs, tag = 'smem constant byte address 0x4 - core index']
  #allocation1 [shape = 'u32[144,128]{1,0:T(1,128)}', space=vmem, size = 0x12000, scoped, tag = 'internal scratch']
  %s0 = inlined_call_operand.vmem [shape: f32[8,32], index: 0, kind: input, shape index: {}]
  %s1 = inlined_call_operand.vmem [shape: f32[8,1], index: 1, kind: input, shape index: {}]
  %s2 = inlined_call_operand.vmem [shape: f32[8,1], index: 2, kind: input, shape index: {}]
  %s3 = inlined_call_operand.vmem [shape: f32[32,1024], index: 3, kind: input, shape index: {}]
  %s4 = inlined_call_operand.vmem [shape: f32[8,1024], index: 4, kind: output, shape index: {}]
  %s5 = sld [smem:[#allocation0]]
  $region72: #{down_conv_block.1} parent=0
    _
  %s7 = ssub.s32 1, %s5
  %s8 = scalar_select 0, %s7, %s5
  $region1: #{down_conv_block.1} parent=0
    #allocation2 [shape = 'u8[131072]{0}', space=vmem, size = 0x20000, scoped, tag = 'input window, operand 3']
    loop: start=0, step=1, limit=4
    $region2: #{down_conv_block.1} parent=1 // loop_pre_header
      _
    $region3: #{down_conv_block.1} parent=1 // loop_header
      %s10 = sphi 0, %s14
      %p11 = scmp.ge.s32.totalorder %s10, 4
      %s18 = sphi 0, %s18
      %s20 = sphi 0, %s18
      %s21 = sphi 0, %s20
      %s35 = sphi 0, %s21
      %s39 = sphi 0, %s39
      %s41 = sphi 0, %s39
      %s42 = sphi 0, %s41
      %s56 = sphi 0, %s42
      %s60 = sphi 0, %s60
      %s62 = sphi 0, %s60
      %s63 = sphi 0, %s62
      %s77 = sphi 0, %s63
      %s83 = sphi 0, %s85
      %s86 = sphi 0, %s83
      %s87 = sphi 0, %s86
      %s103 = sphi 0, %s87
      %s109 = sphi 0, %s111
      %s112 = sphi 0, %s109
      %s113 = sphi 0, %s112
      %s129 = sphi 0, %s113
    $region4: #{down_conv_block.1} parent=1 // loop_header_branch
      %13 = sbr.rel (%p11) target = $region8
    $region5: #{down_conv_block.1} parent=1 // loop_body
      %s15 = ssub.s32 %s10, 1
      %s16 = ssub.s32 %s10, 2
      %s17 = sadd.s32 %s10, 1
      %s19 = sadd.s32 %s18, 1
      %p22 = scmp.eq.s32.totalorder %s10, 1
      %p23 = scmp.ne.s32.totalorder %s18, %s20
      %p24 = scmp.eq.s32.totalorder %s10, 0
      %p25 = por %p23, %p24
      %p26 = scmp.ne.s32.totalorder %s18, %s20
      %p27 = scmp.eq.s32.totalorder %s15, 1
      %p28 = por %p26, %p27
      %p29 = scmp.ne.s32.totalorder %s20, %s21
      %p30 = scmp.eq.s32.totalorder %s15, 0
      %p31 = por %p29, %p30
      %p32 = scmp.ne.s32.totalorder %s20, %s21
      %p33 = scmp.eq.s32.totalorder %s16, 1
      %p34 = por %p32, %p33
      %p36 = scmp.ne.s32.totalorder %s21, %s35
      %p37 = scmp.eq.s32.totalorder %s16, 0
      %p38 = por %p36, %p37
      %s40 = sadd.s32 %s39, 1
      %p43 = scmp.eq.s32.totalorder %s10, 1
      %p44 = scmp.ne.s32.totalorder %s39, %s41
      %p45 = scmp.eq.s32.totalorder %s10, 0
      %p46 = por %p44, %p45
      %p47 = scmp.ne.s32.totalorder %s39, %s41
      %p48 = scmp.eq.s32.totalorder %s15, 1
      %p49 = por %p47, %p48
      %p50 = scmp.ne.s32.totalorder %s41, %s42
      %p51 = scmp.eq.s32.totalorder %s15, 0
      %p52 = por %p50, %p51
      %p53 = scmp.ne.s32.totalorder %s41, %s42
      %p54 = scmp.eq.s32.totalorder %s16, 1
      %p55 = por %p53, %p54
      %p57 = scmp.ne.s32.totalorder %s42, %s56
      %p58 = scmp.eq.s32.totalorder %s16, 0
      %p59 = por %p57, %p58
      %s61 = sadd.s32 %s60, 1
      %p64 = scmp.eq.s32.totalorder %s10, 1
      %p65 = scmp.ne.s32.totalorder %s60, %s62
      %p66 = scmp.eq.s32.totalorder %s10, 0
      %p67 = por %p65, %p66
      %p68 = scmp.ne.s32.totalorder %s60, %s62
      %p69 = scmp.eq.s32.totalorder %s15, 1
      %p70 = por %p68, %p69
      %p71 = scmp.ne.s32.totalorder %s62, %s63
      %p72 = scmp.eq.s32.totalorder %s15, 0
      %p73 = por %p71, %p72
      %p74 = scmp.ne.s32.totalorder %s62, %s63
      %p75 = scmp.eq.s32.totalorder %s16, 1
      %p76 = por %p74, %p75
      %p78 = scmp.ne.s32.totalorder %s63, %s77
      %p79 = scmp.eq.s32.totalorder %s16, 0
      %p80 = por %p78, %p79
      %s81 = ssub.s32 %s10, %s17
      %p82 = scmp.eq.s32.totalorder %s81, 0
      %s84 = sadd.s32 %s83, 1
      %s85 = scalar_select %p82, %s83, %s84
      %p88 = pneg %p82
      %p89 = scmp.eq.s32.totalorder %s10, 1
      %p90 = por %p88, %p89
      %p91 = scmp.ne.s32.totalorder %s83, %s86
      %p92 = scmp.eq.s32.totalorder %s10, 0
      %p93 = por %p91, %p92
      %p94 = scmp.ne.s32.totalorder %s83, %s86
      %p95 = scmp.eq.s32.totalorder %s15, 1
      %p96 = por %p94, %p95
      %p97 = scmp.ne.s32.totalorder %s86, %s87
      %p98 = scmp.eq.s32.totalorder %s15, 0
      %p99 = por %p97, %p98
      %p100 = scmp.ne.s32.totalorder %s86, %s87
      %p101 = scmp.eq.s32.totalorder %s16, 1
      %p102 = por %p100, %p101
      %p104 = scmp.ne.s32.totalorder %s87, %s103
      %p105 = scmp.eq.s32.totalorder %s16, 0
      %p106 = por %p104, %p105
      %s107 = ssub.s32 %s10, %s17
      %p108 = scmp.eq.s32.totalorder %s107, 0
      %s110 = sadd.s32 %s109, 1
      %s111 = scalar_select %p108, %s109, %s110
      %p114 = pneg %p108
      %p115 = scmp.eq.s32.totalorder %s10, 1
      %p116 = por %p114, %p115
      %p117 = scmp.ne.s32.totalorder %s109, %s112
      %p118 = scmp.eq.s32.totalorder %s10, 0
      %p119 = por %p117, %p118
      %p120 = scmp.ne.s32.totalorder %s109, %s112
      %p121 = scmp.eq.s32.totalorder %s15, 1
      %p122 = por %p120, %p121
      %p123 = scmp.ne.s32.totalorder %s112, %s113
      %p124 = scmp.eq.s32.totalorder %s15, 0
      %p125 = por %p123, %p124
      %p126 = scmp.ne.s32.totalorder %s112, %s113
      %p127 = scmp.eq.s32.totalorder %s16, 1
      %p128 = por %p126, %p127
      %p130 = scmp.ne.s32.totalorder %s113, %s129
      %p131 = scmp.eq.s32.totalorder %s16, 0
      %p132 = por %p130, %p131
      %p133 = scmp.le.s32.totalorder 1, %s10
      %p134 = scmp.lt.s32.totalorder %s10, 3
      %p135 = pnand %p133, %p134
      %p136 = pneg %p135
      // Predicated region
      $region9: #{down_conv_block.1} parent=5 // pred_check
        _
      $region10: #{down_conv_block.1} parent=5 // pred_check_branch
        %138 = sbr.rel (%p135) target = $region12
      $region11: #{down_conv_block.1} parent=5 // pred_region
        %s139 = ssub.s32 %s10, 1
        // Predicated region
        $region13: #{down_conv_block.1} parent=11 // pred_check
          %p140 = pneg %p31
        $region14: #{down_conv_block.1} parent=11 // pred_check_branch
          %142 = sbr.rel (%p140) target = $region16
        $region15: #{down_conv_block.1} parent=11 // pred_region
          _
        $region16: #{down_conv_block.1} parent=11 // pred_fallthru
          _
        // Predicated region
        $region17: #{down_conv_block.1} parent=11 // pred_check
          %p143 = pneg %p52
        $region18: #{down_conv_block.1} parent=11 // pred_check_branch
          %145 = sbr.rel (%p143) target = $region20
        $region19: #{down_conv_block.1} parent=11 // pred_region
          _
        $region20: #{down_conv_block.1} parent=11 // pred_fallthru
          _
        // Predicated region
        $region21: #{down_conv_block.1} parent=11 // pred_check
          %p146 = pneg %p73
        $region22: #{down_conv_block.1} parent=11 // pred_check_branch
          %148 = sbr.rel (%p146) target = $region24
        $region23: #{down_conv_block.1} parent=11 // pred_region
          _
        $region24: #{down_conv_block.1} parent=11 // pred_fallthru
          _
      $region12: #{down_conv_block.1} parent=5 // pred_fallthru
        _
      %p149 = scmp.lt.s32.totalorder %s10, 2
      // Predicated region
      $region25: #{down_conv_block.1} parent=5 // pred_check
        %p150 = pneg %p149
      $region26: #{down_conv_block.1} parent=5 // pred_check_branch
        %152 = sbr.rel (%p150) target = $region28
      $region27: #{down_conv_block.1} parent=5 // pred_region
        // Predicated region
        $region29: #{down_conv_block.1} parent=27 // pred_check
          %p153 = pneg %p93
        $region30: #{down_conv_block.1} parent=27 // pred_check_branch
          %155 = sbr.rel (%p153) target = $region32
        $region31: #{down_conv_block.1} parent=27 // pred_region
          %s156 = sand.u32 %s83, 1
          %s157 = sand.u32 %s83, 1
          %s158 = smul.addr %s157, 128
          %s159 = scalar_lea.vmem [#allocation2], %s158
          %s160 = smul.u32 4, %s10
          %s161 = smul.addr %s160, 8
          %s162 = scalar_lea.vmem %s3, %s161
          // Predicated region
          $region33: #{down_conv_block.1} parent=31 // pred_check
            _
          $region34: #{down_conv_block.1} parent=31 // pred_check_branch
            %164 = sbr.rel (0) target = $region36
          $region35: #{down_conv_block.1} parent=31 // pred_region
            // Predicated region
            $region37: #{down_conv_block.1} parent=35 // pred_check
              _
            $region38: #{down_conv_block.1} parent=35 // pred_check_branch
              %166 = sbr.rel (0) target = $region40
            $region39: #{down_conv_block.1} parent=35 // pred_region
              loop: start=0, step=1, limit=1
              $region41: #{down_conv_block.1} parent=39 // loop_pre_header
                _
              $region42: #{down_conv_block.1} parent=39 // loop_header
                %s168 = sphi 0, %s172
                %p169 = scmp.ge.s32.totalorder %s168, 1
                %s173 = sphi %s162, %s162
                %s174 = sphi %s159, %s159
              $region43: #{down_conv_block.1} parent=39 // loop_header_branch
                %171 = sbr.rel (%p169) target = $region47
              $region44: #{down_conv_block.1} parent=39 // loop_body
                %v175 = vld [vmem:[%s173] sm:$0xff]
                %176 = vst [vmem:[%s174] sm:$0xff] %v175
                %v177 = vld [vmem:[%s173 + $0x8] sm:$0xff]
                %178 = vst [vmem:[%s174 + $0x8] sm:$0xff] %v177
                %v179 = vld [vmem:[%s173 + $0x10] sm:$0xff]
                %180 = vst [vmem:[%s174 + $0x10] sm:$0xff] %v179
                %v181 = vld [vmem:[%s173 + $0x18] sm:$0xff]
                %182 = vst [vmem:[%s174 + $0x18] sm:$0xff] %v181
                %v183 = vld [vmem:[%s173 + $0x40] sm:$0xff]
                %184 = vst [vmem:[%s174 + $0x20] sm:$0xff] %v183
                %v185 = vld [vmem:[%s173 + $0x48] sm:$0xff]
                %186 = vst [vmem:[%s174 + $0x28] sm:$0xff] %v185
                %v187 = vld [vmem:[%s173 + $0x50] sm:$0xff]
                %188 = vst [vmem:[%s174 + $0x30] sm:$0xff] %v187
                %v189 = vld [vmem:[%s173 + $0x58] sm:$0xff]
                %190 = vst [vmem:[%s174 + $0x38] sm:$0xff] %v189
                %v191 = vld [vmem:[%s173 + $0x80] sm:$0xff]
                %192 = vst [vmem:[%s174 + $0x40] sm:$0xff] %v191
                %v193 = vld [vmem:[%s173 + $0x88] sm:$0xff]
                %194 = vst [vmem:[%s174 + $0x48] sm:$0xff] %v193
                %v195 = vld [vmem:[%s173 + $0x90] sm:$0xff]
                %196 = vst [vmem:[%s174 + $0x50] sm:$0xff] %v195
                %v197 = vld [vmem:[%s173 + $0x98] sm:$0xff]
                %198 = vst [vmem:[%s174 + $0x58] sm:$0xff] %v197
                %v199 = vld [vmem:[%s173 + $0xc0] sm:$0xff]
                %200 = vst [vmem:[%s174 + $0x60] sm:$0xff] %v199
                %v201 = vld [vmem:[%s173 + $0xc8] sm:$0xff]
                %202 = vst [vmem:[%s174 + $0x68] sm:$0xff] %v201
                %v203 = vld [vmem:[%s173 + $0xd0] sm:$0xff]
                %204 = vst [vmem:[%s174 + $0x70] sm:$0xff] %v203
                %v205 = vld [vmem:[%s173 + $0xd8] sm:$0xff]
                %206 = vst [vmem:[%s174 + $0x78] sm:$0xff] %v205
              $region45: #{down_conv_block.1} parent=39 // loop_footer
                %s172 = sadd.s32 1, %s168
              $region46: #{down_conv_block.1} parent=39 // loop_footer_branch
                %167 = sbr.rel target = $region42
              $region47: #{down_conv_block.1} parent=39 // loop_exit
                _
            $region40: #{down_conv_block.1} parent=35 // pred_fallthru
              _
            // Predicated region
            $region48: #{down_conv_block.1} parent=35 // pred_check
              _
            $region49: #{down_conv_block.1} parent=35 // pred_check_branch
              %208 = sbr.rel target = $region51
            $region50: #{down_conv_block.1} parent=35 // pred_region
              _
            $region51: #{down_conv_block.1} parent=35 // pred_fallthru
              _
          $region36: #{down_conv_block.1} parent=31 // pred_fallthru
            _
          %209 = vnop
        $region32: #{down_conv_block.1} parent=27 // pred_fallthru
          _
      $region28: #{down_conv_block.1} parent=5 // pred_fallthru
        _
      %p210 = scmp.le.s32.totalorder 1, %s10
      %p211 = scmp.lt.s32.totalorder %s10, 3
      %p212 = pnand %p210, %p211
      %p213 = pneg %p212
      // Predicated region
      $region52: #{down_conv_block.1} parent=5 // pred_check
        _
      $region53: #{down_conv_block.1} parent=5 // pred_check_branch
        %215 = sbr.rel (%p212) target = $region55
      $region54: #{down_conv_block.1} parent=5 // pred_region
        %s216 = ssub.s32 %s10, 1
        %s217 = sand.u32 %s86, 1
        %s218 = sand.u32 %s86, 1
        %s219 = smul.addr %s218, 128
        %s220 = scalar_lea.vmem [#allocation2], %s219
        // Predicated region
        $region56: #{down_conv_block.1} parent=54 // pred_check
          %p221 = pneg %p99
        $region57: #{down_conv_block.1} parent=54 // pred_check_branch
          %223 = sbr.rel (%p221) target = $region59
        $region58: #{down_conv_block.1} parent=54 // pred_region
          _
        $region59: #{down_conv_block.1} parent=54 // pred_fallthru
          _
        %p224 = pneg %p31
        %p225 = pneg %p28
        %p226 = pneg %p52
        %p227 = pneg %p49
        %p228 = pneg %p73
        %p229 = pneg %p70
        %s230 = sand.u32 %s86, 1
        %s231 = sand.u32 %s86, 1
        %s232 = smul.addr %s231, 128
        %s233 = scalar_lea.vmem [#allocation2], %s232
        %p234 = pneg %p99
        %p235 = pneg %p96
        %p236 = pneg %p125
        %p237 = pneg %p122
        %s238 = smul.u32 4, %s15
        %p239 = scmp.lt.s32.totalorder %s238, 7
        %s240 = scalar_select %p239, %s238, 7
        %s241 = smul.addr %s240, 8
        %s242 = scalar_lea.vmem %s4, %s241
        %s243 = smul.u32 4, %s15
        %s244 = smul.u32 4, %s15
        %p245 = scmp.lt.s32.totalorder %s244, 7
        %s246 = scalar_select %p245, %s244, 7
        %s247 = smul.addr %s246, 8
        %s248 = scalar_lea.vmem %s4, %s247
        %s249 = smul.u32 4, %s15
        %v250 = vld [vmem:[%s0] sm:$0xff]
        %v251 = vld [vmem:[%s220] sm:$0xff]
        %v252 = vld [vmem:[%s220 + $0x8] sm:$0xff]
        %v253 = vld [vmem:[%s220 + $0x10] sm:$0xff]
        %v254 = vld [vmem:[%s220 + $0x18] sm:$0xff]
        %v255 = vld [vmem:[%s220 + $0x20] sm:$0xff]
        %v256 = vld [vmem:[%s220 + $0x28] sm:$0xff]
        %v257 = vld [vmem:[%s220 + $0x30] sm:$0xff]
        %v258 = vld [vmem:[%s220 + $0x38] sm:$0xff]
        %v259 = vld [vmem:[%s220 + $0x40] sm:$0xff]
        %v260 = vld [vmem:[%s220 + $0x48] sm:$0xff]
        %v261 = vld [vmem:[%s220 + $0x50] sm:$0xff]
        %v262 = vld [vmem:[%s220 + $0x58] sm:$0xff]
        %v263 = vld [vmem:[%s220 + $0x60] sm:$0xff]
        %v264 = vld [vmem:[%s220 + $0x68] sm:$0xff]
        %v265 = vld [vmem:[%s220 + $0x70] sm:$0xff]
        %v266 = vld [vmem:[%s220 + $0x78] sm:$0xff]
        %v267 = vld [vmem:[%s1] sm:$0xff]
        %269 = vset.pattern.permute.xlu0 0
        %270 = vperm.xlu0 %269, %v267
        %v271 = vpop.permute.xlu0 %270
        %vm273 = vcmask 261120
        %v275 = vsel %vm273, %v250, 0
        %277 = vmatprep.subr.mxu0 %v252
        %278 = vmatpush1.msra.mxu0 %v251
        %279 = vmatprep.subr.mxu0 %v256
        %280 = vmatpush1.msra.mxu0 %v255
        %281 = vmatprep.subr.mxu0 %v260
        %282 = vmatpush1.msra.mxu0 %v259
        %283 = vmatprep.subr.mxu0 %v264
        %284 = vmatpush1.msra.mxu0 %v263
        %285 = vmatprep.subr.mxu0 0.0
        %286 = vmatpush1.msra.mxu0 0.0
        %287 = vmatprep.subr.mxu0 0.0
        %288 = vmatpush1.msra.mxu0 0.0
        %289 = vmatprep.subr.mxu0 0.0
        %290 = vmatpush1.msra.mxu0 0.0
        %291 = vmatprep.subr.mxu0 0.0
        %292 = vmatpush1.msra.mxu0 0.0
        %293 = vmatprep.subr.mxu0 0.0
        %294 = vmatpush1.msra.mxu0 0.0
        %295 = vmatprep.subr.mxu0 0.0
        %296 = vmatpush1.msra.mxu0 0.0
        %297 = vmatprep.subr.mxu0 0.0
        %298 = vmatpush1.msra.mxu0 0.0
        %299 = vmatprep.subr.mxu0 0.0
        %300 = vmatpush1.msra.mxu0 0.0
        %301 = vmatprep.subr.mxu0 0.0
        %302 = vmatpush1.msra.mxu0 0.0
        %303 = vmatprep.subr.mxu0 0.0
        %304 = vmatpush1.msra.mxu0 0.0
        %305 = vmatprep.subr.mxu0 0.0
        %306 = vmatpush1.msra.mxu0 0.0
        %307 = vmatprep.subr.mxu0 0.0
        %308 = vmatpush1.msra.mxu0 0.0
        %309 = vmatprep.subr.mxu0 0.0
        %310 = vmatpush1.msra.mxu0 0.0
        %311 = vmatprep.subr.mxu0 0.0
        %312 = vmatpush1.msra.mxu0 0.0
        %313 = vmatprep.subr.mxu0 0.0
        %314 = vmatpush1.msra.mxu0 0.0
        %315 = vmatprep.subr.mxu0 0.0
        %316 = vmatpush1.msra.mxu0 0.0
        %317 = vmatprep.subr.mxu0 0.0
        %318 = vmatpush1.msra.mxu0 0.0
        %319 = vmatprep.subr.mxu0 0.0
        %320 = vmatpush1.msra.mxu0 0.0
        %321 = vmatprep.subr.mxu0 0.0
        %322 = vmatpush1.msra.mxu0 0.0
        %323 = vmatprep.subr.mxu0 0.0
        %324 = vmatpush1.msra.mxu0 0.0
        %325 = vmatprep.subr.mxu0 0.0
        %326 = vmatpush1.msra.mxu0 0.0
        %327 = vmatprep.subr.mxu0 0.0
        %328 = vmatpush1.msra.mxu0 0.0
        %329 = vmatprep.subr.mxu0 0.0
        %330 = vmatpush1.msra.mxu0 0.0
        %331 = vmatprep.subr.mxu0 0.0
        %332 = vmatpush1.msra.mxu0 0.0
        %333 = vmatprep.subr.mxu0 0.0
        %334 = vmatpush1.msra.mxu0 0.0
        %335 = vmatprep.subr.mxu0 0.0
        %336 = vmatpush1.msra.mxu0 0.0
        %337 = vmatprep.subr.mxu0 0.0
        %338 = vmatpush1.msra.mxu0 0.0
        %339 = vmatprep.subr.mxu0 0.0
        %340 = vmatpush1.msra.mxu0 0.0
        %341 = vmatprep.mubr.f32.mxu0 0.0
        %342 = vmatmul.mubr.f32.gmra.mrb[0].mxu0 %v275
        %v343 = vpop.f32.mrb[0].mxu0
        %v344 = vadd.f32 %v271, %v343
        %v345 = vpop.f32.mrb[0].mxu0
        %v346 = vadd.f32 %v271, %v345
        %347 = vdwg.mxu0
        %348 = vmatprep.subr.mxu0 %v254
        %349 = vmatpush1.msra.mxu0 %v253
        %350 = vmatprep.subr.mxu0 %v258
        %351 = vmatpush1.msra.mxu0 %v257
        %352 = vmatprep.subr.mxu0 %v262
        %353 = vmatpush1.msra.mxu0 %v261
        %354 = vmatprep.subr.mxu0 %v266
        %355 = vmatpush1.msra.mxu0 %v265
        %356 = vmatprep.subr.mxu0 0.0
        %357 = vmatpush1.msra.mxu0 0.0
        %358 = vmatprep.subr.mxu0 0.0
        %359 = vmatpush1.msra.mxu0 0.0
        %360 = vmatprep.subr.mxu0 0.0
        %361 = vmatpush1.msra.mxu0 0.0
        %362 = vmatprep.subr.mxu0 0.0
        %363 = vmatpush1.msra.mxu0 0.0
        %364 = vmatprep.subr.mxu0 0.0
        %365 = vmatpush1.msra.mxu0 0.0
        %366 = vmatprep.subr.mxu0 0.0
        %367 = vmatpush1.msra.mxu0 0.0
        %368 = vmatprep.subr.mxu0 0.0
        %369 = vmatpush1.msra.mxu0 0.0
        %370 = vmatprep.subr.mxu0 0.0
        %371 = vmatpush1.msra.mxu0 0.0
        %372 = vmatprep.subr.mxu0 0.0
        %373 = vmatpush1.msra.mxu0 0.0
        %374 = vmatprep.subr.mxu0 0.0
        %375 = vmatpush1.msra.mxu0 0.0
        %376 = vmatprep.subr.mxu0 0.0
        %377 = vmatpush1.msra.mxu0 0.0
        %378 = vmatprep.subr.mxu0 0.0
        %379 = vmatpush1.msra.mxu0 0.0
        %380 = vmatprep.subr.mxu0 0.0
        %381 = vmatpush1.msra.mxu0 0.0
        %382 = vmatprep.subr.mxu0 0.0
        %383 = vmatpush1.msra.mxu0 0.0
        %384 = vmatprep.subr.mxu0 0.0
        %385 = vmatpush1.msra.mxu0 0.0
        %386 = vmatprep.subr.mxu0 0.0
        %387 = vmatpush1.msra.mxu0 0.0
        %388 = vmatprep.subr.mxu0 0.0
        %389 = vmatpush1.msra.mxu0 0.0
        %390 = vmatprep.subr.mxu0 0.0
        %391 = vmatpush1.msra.mxu0 0.0
        %392 = vmatprep.subr.mxu0 0.0
        %393 = vmatpush1.msra.mxu0 0.0
        %394 = vmatprep.subr.mxu0 0.0
        %395 = vmatpush1.msra.mxu0 0.0
        %396 = vmatprep.subr.mxu0 0.0
        %397 = vmatpush1.msra.mxu0 0.0
        %398 = vmatprep.subr.mxu0 0.0
        %399 = vmatpush1.msra.mxu0 0.0
        %400 = vmatprep.subr.mxu0 0.0
        %401 = vmatpush1.msra.mxu0 0.0
        %402 = vmatprep.subr.mxu0 0.0
        %403 = vmatpush1.msra.mxu0 0.0
        %404 = vmatprep.subr.mxu0 0.0
        %405 = vmatpush1.msra.mxu0 0.0
        %406 = vmatprep.subr.mxu0 0.0
        %407 = vmatpush1.msra.mxu0 0.0
        %408 = vmatprep.subr.mxu0 0.0
        %409 = vmatpush1.msra.mxu0 0.0
        %410 = vmatprep.subr.mxu0 0.0
        %411 = vmatpush1.msra.mxu0 0.0
        %412 = vmatprep.mubr.f32.mxu0 0.0
        %413 = vmatmul.mubr.f32.gmra.mrb[0].mxu0 %v275
        %v414 = vpop.f32.mrb[0].mxu0
        %v415 = vadd.f32 %v271, %v414
        %v416 = vpop.f32.mrb[0].mxu0
        %v417 = vadd.f32 %v271, %v416
        %418 = vdwg.mxu0
        %vm419 = vcmp.ge.f32.partialorder %v344, 0.0
        %vm420 = vcmp.ge.f32.partialorder %v346, 0.0
        %vm421 = vcmp.ge.f32.partialorder %v415, 0.0
        %vm422 = vcmp.ge.f32.partialorder %v417, 0.0
        %v423 = vld [vmem:[%s2] sm:$0xff]
        %425 = vset.pattern.permute.xlu0 0
        %426 = vperm.xlu0 %425, %v423
        %v427 = vpop.permute.xlu0 %426
        %v429 = vmul.f32 %v427, %v344
        %v430 = vmul.f32 %v427, %v346
        %v431 = vmul.f32 %v427, %v415
        %v432 = vmul.f32 %v427, %v417
        %v433 = vsel %vm419, %v344, %v429
        %v434 = vsel %vm420, %v346, %v430
        %v435 = vsel %vm421, %v415, %v431
        %v436 = vsel %vm422, %v417, %v432
        %437 = vst [vmem:[%s248] sm:$0xff] %v433
        %438 = vst [vmem:[%s248 + $0x8] sm:$0xff] %v434
        %439 = vst [vmem:[%s248 + $0x10] sm:$0xff] %v435
        %440 = vst [vmem:[%s248 + $0x18] sm:$0xff] %v436
        %s441 = smul.u32 4, %s15
        %p442 = scmp.lt.s32.totalorder %s441, 7
        %s443 = scalar_select %p442, %s441, 7
        %s444 = smul.addr %s443, 8
        %s445 = scalar_lea.vmem %s4, %s444
        // Predicated region
        $region60: #{down_conv_block.1} parent=54 // pred_check
          %p446 = pneg %p122
        $region61: #{down_conv_block.1} parent=54 // pred_check_branch
          %448 = sbr.rel (%p446) target = $region63
        $region62: #{down_conv_block.1} parent=54 // pred_region
          %s449 = smul.u32 4, %s15
        $region63: #{down_conv_block.1} parent=54 // pred_fallthru
          _
      $region55: #{down_conv_block.1} parent=5 // pred_fallthru
        _
      %p450 = scmp.le.s32.totalorder 2, %s10
      // Predicated region
      $region64: #{down_conv_block.1} parent=5 // pred_check
        %p451 = pneg %p450
      $region65: #{down_conv_block.1} parent=5 // pred_check_branch
        %453 = sbr.rel (%p451) target = $region67
      $region66: #{down_conv_block.1} parent=5 // pred_region
        %s454 = ssub.s32 %s10, 2
        // Predicated region
        $region68: #{down_conv_block.1} parent=66 // pred_check
          %p455 = pneg %p128
        $region69: #{down_conv_block.1} parent=66 // pred_check_branch
          %457 = sbr.rel (%p455) target = $region71
        $region70: #{down_conv_block.1} parent=66 // pred_region
          %s458 = smul.u32 4, %s16
          %p459 = scmp.lt.s32.totalorder %s458, 7
          %s460 = scalar_select %p459, %s458, 7
          %s461 = smul.addr %s460, 8
          %s462 = scalar_lea.vmem %s4, %s461
        $region71: #{down_conv_block.1} parent=66 // pred_fallthru
          _
      $region67: #{down_conv_block.1} parent=5 // pred_fallthru
        _
    $region6: #{down_conv_block.1} parent=1 // loop_footer
      %s14 = sadd.s32 1, %s10
    $region7: #{down_conv_block.1} parent=1 // loop_footer_branch
      %9 = sbr.rel target = $region3
    $region8: #{down_conv_block.1} parent=1 // loop_exit
      _

</llo_original>
